<compile_context>
chip_gen: v5e
topology: v5e:2x2
jax: 0.10.0
libtpu: 0.0.40
codegen_flags: <defaults>
</compile_context>

<pallas_src>
import functools

import jax
import jax.numpy as jnp
from jax import lax
from jax.experimental import pallas as pl
from jax.experimental.pallas import tpu as pltpu


# ----------------------------------------------------------------------------
# VMEM / tiling helpers
# ----------------------------------------------------------------------------
def _vmem_limit_bytes():
    """Generation-aware scoped-VMEM limit (75% of physical, capped at 96 MiB)."""
    cap = 128 << 20
    try:
        info = pltpu.get_tpu_info()
        cap = int(getattr(info, "vmem_capacity_bytes", cap)) or cap
    except Exception:
        pass
    return int(min(96 << 20, cap * 3 // 4))


def _min_sublane(dtype):
    """Minimum sublane tile for a dtype: 8 (f32), 16 (bf16), 32 (int8)."""
    return max(8, 32 // max(jnp.dtype(dtype).itemsize, 1))


def _pick_tile(total, unit_bytes, vmem_limit, min_tile):
    """Tile size along an independent (per-row / per-channel) axis.

    Returns a multiple of `min_tile` (or `total` when total is smaller) such
    that `tile * unit_bytes <= vmem_limit`, and leaves >= 2 grid steps whenever
    the axis can be split (DMA/compute overlap + v7x megacore sharding).
    """
    if total <= min_tile:
        return total
    cap = (vmem_limit // max(unit_bytes, 1)) // min_tile * min_tile
    cap = max(min_tile, min(cap, total))
    half = -(-total // 2)                          # ceil(total / 2)
    half = -(-half // min_tile) * min_tile         # round up to multiple
    return min(cap, max(min_tile, half))


# ----------------------------------------------------------------------------
# Pallas kernels
# ----------------------------------------------------------------------------
def _instancenorm_kernel(eps, x_ref, o_ref):
    # x_ref: (tr, HW) -- each row is one (n, c) instance, HW on the lane axis.
    x = x_ref[...].astype(jnp.float32)
    mean = jnp.mean(x, axis=-1, keepdims=True)                 # XLU lane reduce
    xc = x - mean                                              # centered, reused
    var = jnp.mean(xc * xc, axis=-1, keepdims=True)
    inv = lax.rsqrt(var + eps)                                 # EUP
    o_ref[...] = (xc * inv).astype(o_ref.dtype)


def _batchnorm_fused_kernel(eps, x_ref, g_ref, b_ref, o_ref):
    # x_ref: (N, tc, HW) -- full batch + full spatial for a block of channels,
    # so the per-channel batch statistic is computed entirely in VMEM.
    x = x_ref[...].astype(jnp.float32)
    mean = jnp.mean(x, axis=(0, 2), keepdims=True)             # (1, tc, 1)
    xc = x - mean
    var = jnp.mean(xc * xc, axis=(0, 2), keepdims=True)
    inv = lax.rsqrt(var + eps)                                 # EUP
    g = g_ref[...].astype(jnp.float32)[jnp.newaxis]            # (1, tc, 1)
    b = b_ref[...].astype(jnp.float32)[jnp.newaxis]
    scale = inv * g                                            # per-channel
    o_ref[...] = (xc * scale + b).astype(o_ref.dtype)          # 2 VPU passes


def _bn_stats_kernel(eps, inv_count, x_ref, g_ref, b_ref,
                     scale_ref, shift_ref, sum_sc, ssq_sc):
    # Two-pass fallback, pass 1: accumulate per-channel sum / sumsq over the
    # N grid axis; finalize into per-channel scale/shift on the last step.
    n = pl.program_id(1)

    @pl.when(n == 0)
    def _():
        sum_sc[...] = jnp.zeros_like(sum_sc)
        ssq_sc[...] = jnp.zeros_like(ssq_sc)

    x = x_ref[0].astype(jnp.float32)                           # (tc, HW)
    sum_sc[...] += jnp.sum(x, axis=-1, keepdims=True)          # (tc, 1)
    ssq_sc[...] += jnp.sum(x * x, axis=-1, keepdims=True)

    @pl.when(n == pl.num_programs(1) - 1)
    def _():
        mean = sum_sc[...] * inv_count
        var = jnp.maximum(ssq_sc[...] * inv_count - mean * mean, 0.0)
        inv = lax.rsqrt(var + eps)                             # EUP
        scale = inv * g_ref[...].astype(jnp.float32)
        scale_ref[...] = scale
        shift_ref[...] = b_ref[...].astype(jnp.float32) - mean * scale


def _bn_apply_kernel(x_ref, scale_ref, shift_ref, o_ref):
    # Two-pass fallback, pass 2: o = x * scale + shift (per-channel broadcast).
    x = x_ref[0].astype(jnp.float32)                           # (tc, HW)
    y = x * scale_ref[...] + shift_ref[...]
    o_ref[...] = y[jnp.newaxis].astype(o_ref.dtype)


# ----------------------------------------------------------------------------
# Wrappers
# ----------------------------------------------------------------------------
def instance_norm_2d(x, eps=1e-5):
    """nn.InstanceNorm2d forward (affine=False, no running stats)."""
    N, C, H, W = x.shape
    NC, HW = N * C, H * W
    x2 = x.reshape(NC, HW)                        # contiguous reshape, no transpose
    itemsize = x.dtype.itemsize
    vmem_limit = _vmem_limit_bytes()
    min_tile = _min_sublane(x.dtype)
    # per-row bytes: in+out double-buffered (input dtype) + ~3 f32 temporaries
    unit = HW * (4 * itemsize + 3 * 4)
    tr = _pick_tile(NC, unit, vmem_limit, min_tile)

    out = pl.pallas_call(
        functools.partial(_instancenorm_kernel, eps),
        out_shape=jax.ShapeDtypeStruct((NC, HW), x.dtype),
        grid=(pl.cdiv(NC, tr),),
        in_specs=[pl.BlockSpec((tr, HW), lambda i: (i, 0))],
        out_specs=pl.BlockSpec((tr, HW), lambda i: (i, 0)),
        compiler_params=pltpu.CompilerParams(
            dimension_semantics=("parallel",),
            vmem_limit_bytes=vmem_limit),
    )(x2)
    return out.reshape(N, C, H, W)


def batch_norm_2d(x, gamma, beta, eps=1e-5, force_two_pass=False):
    """nn.BatchNorm2d training-mode forward (batch statistics, affine).

    Uses a single fused kernel when the (N, tc, HW) block fits VMEM; otherwise
    a two-pass (stats + normalize) fallback.
    """
    # TODO(synk): running-stat tracking / eval-mode running-stat normalization
    # is a training-loop side effect and is not reproduced here.
    N, C, H, W = x.shape
    HW = H * W
    x3 = x.reshape(N, C, HW)                      # contiguous reshape, no transpose
    itemsize = x.dtype.itemsize
    vmem_limit = _vmem_limit_bytes()
    min_tile = _min_sublane(x.dtype)
    g2 = gamma.reshape(C, 1).astype(jnp.float32)
    b2 = beta.reshape(C, 1).astype(jnp.float32)

    # ---- fused single-pass path (only when it genuinely fits VMEM) ----------
    fused_unit = N * HW * (4 * itemsize + 3 * 4)  # bytes per resident channel
    min_tc = C if C <= min_tile else min_tile
    if (min_tc * fused_unit <= vmem_limit) and not force_two_pass:
        tc = _pick_tile(C, fused_unit, vmem_limit, min_tile)
        out = pl.pallas_call(
            functools.partial(_batchnorm_fused_kernel, eps),
            out_shape=jax.ShapeDtypeStruct((N, C, HW), x.dtype),
            grid=(pl.cdiv(C, tc),),
            in_specs=[pl.BlockSpec((N, tc, HW), lambda j: (0, j, 0)),
                      pl.BlockSpec((tc, 1), lambda j: (j, 0)),
                      pl.BlockSpec((tc, 1), lambda j: (j, 0))],
            out_specs=pl.BlockSpec((N, tc, HW), lambda j: (0, j, 0)),
            compiler_params=pltpu.CompilerParams(
                dimension_semantics=("parallel",),
                vmem_limit_bytes=vmem_limit),
        )(x3, g2, b2)
        return out.reshape(N, C, H, W)

    # ---- two-pass fallback for large N*H*W -----------------------------------
    inv_count = 1.0 / float(N * HW)

    # Pass 1: per-channel batch stats -> per-channel scale/shift.
    stats_unit = HW * (2 * itemsize + 2 * 4)      # one n per step, per channel
    tc_s = _pick_tile(C, stats_unit, vmem_limit, min_tile)
    scale, shift = pl.pallas_call(
        functools.partial(_bn_stats_kernel, eps, inv_count),
        out_shape=(jax.ShapeDtypeStruct((C, 1), jnp.float32),
                   jax.ShapeDtypeStruct((C, 1), jnp.float32)),
        grid=(pl.cdiv(C, tc_s), N),
        in_specs=[pl.BlockSpec((1, tc_s, HW), lambda c, n: (n, c, 0)),
                  pl.BlockSpec((tc_s, 1), lambda c, n: (c, 0)),
                  pl.BlockSpec((tc_s, 1), lambda c, n: (c, 0))],
        out_specs=(pl.BlockSpec((tc_s, 1), lambda c, n: (c, 0)),
                   pl.BlockSpec((tc_s, 1), lambda c, n: (c, 0))),
        scratch_shapes=[pltpu.VMEM((tc_s, 1), jnp.float32),
                        pltpu.VMEM((tc_s, 1), jnp.float32)],
        compiler_params=pltpu.CompilerParams(
            dimension_semantics=("parallel", "arbitrary"),
            vmem_limit_bytes=vmem_limit),
    )(x3, g2, b2)

    # Pass 2: elementwise normalize  o = x * scale + shift.
    apply_unit = HW * (4 * itemsize + 2 * 4)
    tc_a = _pick_tile(C, apply_unit, vmem_limit, min_tile)
    out = pl.pallas_call(
        _bn_apply_kernel,
        out_shape=jax.ShapeDtypeStruct((N, C, HW), x.dtype),
        grid=(pl.cdiv(C, tc_a), N),
        in_specs=[pl.BlockSpec((1, tc_a, HW), lambda c, n: (n, c, 0)),
                  pl.BlockSpec((tc_a, 1), lambda c, n: (c, 0)),
                  pl.BlockSpec((tc_a, 1), lambda c, n: (c, 0))],
        out_specs=pl.BlockSpec((1, tc_a, HW), lambda c, n: (n, c, 0)),
        compiler_params=pltpu.CompilerParams(
            dimension_semantics=("parallel", "parallel"),
            vmem_limit_bytes=vmem_limit),
    )(x3, scale, shift)
    return out.reshape(N, C, H, W)


class NormLayer:
    """JAX/Pallas port of the PyTorch NormLayer module."""

    def __init__(self, in_channels, norm_type):
        assert norm_type in ("batchnorm", "instancenorm", "none"), (
            "Please specify a norm type from the set {batchnorm, instancenorm, none}")
        self.in_channels = in_channels
        self.norm_type = norm_type
        if norm_type == "batchnorm":
            # nn.BatchNorm2d defaults: weight=1, bias=0 (learnable -> overridable).
            self.gamma = jnp.ones((in_channels,), jnp.float32)
            self.beta = jnp.zeros((in_channels,), jnp.float32)

    def __call__(self, x):
        if self.norm_type == "batchnorm":
            return batch_norm_2d(x, self.gamma, self.beta)
        if self.norm_type == "instancenorm":
            return instance_norm_2d(x)
        return x  # NoNorm: identity (matches the PyTorch forward)


# ----------------------------------------------------------------------------
# Plain-JAX references (correctness check)
# ----------------------------------------------------------------------------
def _ref_batchnorm(x, gamma, beta, eps=1e-5):
    mean = jnp.mean(x, axis=(0, 2, 3), keepdims=True)
    var = jnp.mean((x - mean) ** 2, axis=(0, 2, 3), keepdims=True)
    xn = (x - mean) / jnp.sqrt(var + eps)
    return xn * gamma.reshape(1, -1, 1, 1) + beta.reshape(1, -1, 1, 1)


def _ref_instancenorm(x, eps=1e-5):
    mean = jnp.mean(x, axis=(2, 3), keepdims=True)
    var = jnp.mean((x - mean) ** 2, axis=(2, 3), keepdims=True)
    return (x - mean) / jnp.sqrt(var + eps)


# ----------------------------------------------------------------------------
if __name__ == "__main__":
    key = jax.random.PRNGKey(0)
    k_x, k_g, k_b, k_x2 = jax.random.split(key, 4)

    # ---- small shape from the module spec ------------------------------------
    N, C, H, W = 2, 4, 16, 16
    x = jax.random.normal(k_x, (N, C, H, W), jnp.float32)

    bn = NormLayer(C, "batchnorm")
    bn.gamma = 1.0 + 0.1 * jax.random.normal(k_g, (C,), jnp.float32)
    bn.beta = 0.1 * jax.random.normal(k_b, (C,), jnp.float32)
    y_bn = jax.block_until_ready(bn(x))
    r_bn = _ref_batchnorm(x, bn.gamma, bn.beta)
    assert y_bn.shape == x.shape, y_bn.shape
    assert jnp.allclose(y_bn, r_bn, atol=1e-4, rtol=1e-4), \
        float(jnp.max(jnp.abs(y_bn - r_bn)))

    # two-pass fallback path (same semantics, used for large N*H*W)
    y_bn2 = jax.block_until_ready(
        batch_norm_2d(x, bn.gamma, bn.beta, force_two_pass=True))
    assert jnp.allclose(y_bn2, r_bn, atol=1e-3, rtol=1e-3), \
        float(jnp.max(jnp.abs(y_bn2 - r_bn)))

    inorm = NormLayer(C, "instancenorm")
    y_in = jax.block_until_ready(inorm(x))
    r_in = _ref_instancenorm(x)
    assert y_in.shape == x.shape, y_in.shape
    assert jnp.allclose(y_in, r_in, atol=1e-4, rtol=1e-4), \
        float(jnp.max(jnp.abs(y_in - r_in)))

    none = NormLayer(C, "none")
    y_none = jax.block_until_ready(none(x))
    assert jnp.array_equal(y_none, x)

    # ---- second shape: non-multiple-of-8 channel axis exercises the cdiv grid
    # (ragged-tail blocks) and the >=2-grid-step tiling. ------------------------
    N2, C2 = 3, 12
    x2 = jax.random.normal(k_x2, (N2, C2, H, W), jnp.float32)
    g2 = 1.0 + 0.05 * jnp.arange(C2, dtype=jnp.float32)
    b2 = 0.02 * jnp.arange(C2, dtype=jnp.float32)

    y2_bn = jax.block_until_ready(batch_norm_2d(x2, g2, b2))
    assert jnp.allclose(y2_bn, _ref_batchnorm(x2, g2, b2), atol=1e-4, rtol=1e-4)

    y2_bn2 = jax.block_until_ready(batch_norm_2d(x2, g2, b2, force_two_pass=True))
    assert jnp.allclose(y2_bn2, _ref_batchnorm(x2, g2, b2), atol=1e-3, rtol=1e-3)

    y2_in = jax.block_until_ready(instance_norm_2d(x2))
    assert jnp.allclose(y2_in, _ref_instancenorm(x2), atol=1e-4, rtol=1e-4)

    print("KERNEL_OK")
</pallas_src>

<mosaic_0001>
module attributes {stable_mosaic.version = 11 : i64} {
  func.func @_batchnorm_fused_kernel(%arg0: i32, %arg1: memref<2x4x256xf32, #tpu.memory_space<vmem>>, %arg2: memref<4x1xf32, #tpu.memory_space<vmem>>, %arg3: memref<4x1xf32, #tpu.memory_space<vmem>>, %arg4: memref<2x4x256xf32, #tpu.memory_space<vmem>>) attributes {dimension_semantics = [#tpu.dimension_semantics<parallel>], iteration_bounds = array<i64: 1>, scalar_prefetch = 0 : i64, scratch_operands = 0 : i64, tpu.core_type = #tpu.core_type<tc>, window_params = [{transform_indices = @transform_0, window_bounds = array<i64: 2, 4, 256>}, {transform_indices = @transform_1, window_bounds = array<i64: 4, 1>}, {transform_indices = @transform_2, window_bounds = array<i64: 4, 1>}, {transform_indices = @transform_3, window_bounds = array<i64: 2, 4, 256>}]} {
    %c0 = arith.constant 0 : index
    %c0_0 = arith.constant 0 : index
    %c0_1 = arith.constant 0 : index
    %0 = vector.load %arg1[%c0, %c0_0, %c0_1] : memref<2x4x256xf32, #tpu.memory_space<vmem>>, vector<2x4x256xf32>
    %cst = arith.constant dense<0.000000e+00> : vector<4xf32>
    %1 = vector.multi_reduction <add>, %0, %cst [0, 2] : vector<2x4x256xf32> to vector<4xf32>
    %2 = vector.shape_cast %1 : vector<4xf32> to vector<1x4x1xf32>
    %cst_2 = arith.constant 5.120000e+02 : f32
    %3 = vector.broadcast %cst_2 : f32 to vector<1x4x1xf32>
    %4 = arith.divf %2, %3 : vector<1x4x1xf32>
    %5 = vector.broadcast %4 : vector<1x4x1xf32> to vector<2x4x256xf32>
    %6 = arith.subf %0, %5 : vector<2x4x256xf32>
    %7 = arith.mulf %6, %6 : vector<2x4x256xf32>
    %cst_3 = arith.constant dense<0.000000e+00> : vector<4xf32>
    %8 = vector.multi_reduction <add>, %7, %cst_3 [0, 2] : vector<2x4x256xf32> to vector<4xf32>
    %9 = vector.shape_cast %8 : vector<4xf32> to vector<1x4x1xf32>
    %cst_4 = arith.constant 5.120000e+02 : f32
    %10 = vector.broadcast %cst_4 : f32 to vector<1x4x1xf32>
    %11 = arith.divf %9, %10 : vector<1x4x1xf32>
    %cst_5 = arith.constant 9.99999974E-6 : f32
    %12 = vector.broadcast %cst_5 : f32 to vector<1x4x1xf32>
    %13 = arith.addf %11, %12 : vector<1x4x1xf32>
    %14 = math.rsqrt %13 : vector<1x4x1xf32>
    %c0_6 = arith.constant 0 : index
    %c0_7 = arith.constant 0 : index
    %15 = vector.load %arg2[%c0_6, %c0_7] : memref<4x1xf32, #tpu.memory_space<vmem>>, vector<4x1xf32>
    %16 = vector.shape_cast %15 : vector<4x1xf32> to vector<1x4x1xf32>
    %c0_8 = arith.constant 0 : index
    %c0_9 = arith.constant 0 : index
    %17 = vector.load %arg3[%c0_8, %c0_9] : memref<4x1xf32, #tpu.memory_space<vmem>>, vector<4x1xf32>
    %18 = vector.shape_cast %17 : vector<4x1xf32> to vector<1x4x1xf32>
    %19 = arith.mulf %14, %16 : vector<1x4x1xf32>
    %20 = vector.broadcast %19 : vector<1x4x1xf32> to vector<2x4x256xf32>
    %21 = arith.mulf %6, %20 : vector<2x4x256xf32>
    %22 = vector.broadcast %18 : vector<1x4x1xf32> to vector<2x4x256xf32>
    %23 = arith.addf %21, %22 : vector<2x4x256xf32>
    %c0_10 = arith.constant 0 : index
    %c0_11 = arith.constant 0 : index
    %c0_12 = arith.constant 0 : index
    %24 = vector.load %arg4[%c0_10, %c0_11, %c0_12] : memref<2x4x256xf32, #tpu.memory_space<vmem>>, vector<2x4x256xf32>
    tpu.vector_store %arg4[%c0_10, %c0_11, %c0_12], %23 {strides = array<i32>} : memref<2x4x256xf32, #tpu.memory_space<vmem>>, vector<2x4x256xf32>,
    return
  }
  func.func @transform_0(%arg0: i32) -> (i32, i32, i32) {
    %c0_i32 = arith.constant 0 : i32
    %c0_i32_0 = arith.constant 0 : i32
    %c0_i32_1 = arith.constant 0 : i32
    return %c0_i32, %arg0, %c0_i32_0 : i32, i32, i32
  }
  func.func @transform_1(%arg0: i32) -> (i32, i32) {
    %c0_i32 = arith.constant 0 : i32
    %c0_i32_0 = arith.constant 0 : i32
    return %arg0, %c0_i32 : i32, i32
  }
  func.func @transform_2(%arg0: i32) -> (i32, i32) {
    %c0_i32 = arith.constant 0 : i32
    %c0_i32_0 = arith.constant 0 : i32
    return %arg0, %c0_i32 : i32, i32
  }
  func.func @transform_3(%arg0: i32) -> (i32, i32, i32) {
    %c0_i32 = arith.constant 0 : i32
    %c0_i32_0 = arith.constant 0 : i32
    %c0_i32_1 = arith.constant 0 : i32
    return %c0_i32, %arg0, %c0_i32_0 : i32, i32, i32
  }
}

</mosaic_0001>

<llo_original>
// kernel: tpu_custom_call.1
$region0: #{tpu_custom_call.1}
  #allocation0 [shape = 'u32[]', space=smem, size = 0x4, offset = 0x4, fixed_abs, tag = 'smem constant byte address 0x4 - core index']
  #allocation1 [shape = 'u32[72,128]{1,0:T(1,128)}', space=vmem, size = 0x9000, scoped, tag = 'internal scratch']
  %s0 = inlined_call_operand.hbm [shape: f32[2,4,256], index: 0, kind: input, shape index: {}]
  %s1 = inlined_call_operand.vmem [shape: f32[4,1], index: 1, kind: input, shape index: {}]
  %s2 = inlined_call_operand.vmem [shape: f32[4,1], index: 2, kind: input, shape index: {}]
  %s3 = inlined_call_operand.hbm [shape: f32[2,4,256], index: 3, kind: output, shape index: {}]
  %s4 = sld [smem:[#allocation0]]
  $region26: #{tpu_custom_call.1} parent=0
    _
  %s6 = ssub.s32 1, %s4
  %s7 = scalar_select 0, %s6, %s4
  $region1: #{tpu_custom_call.1} parent=0
    #allocation2 [shape = 'u8[8192]{0}', space=vmem, size = 0x2000, scoped, tag = 'input window, operand 0, single buffered']
    #allocation3 [shape = 's32[1]{0}', space=sflag, size = 0x4, scoped, tag = 'scoped memory for tpu_custom_call.1']
    #allocation4 [shape = 's32[1]{0}', space=sflag, size = 0x4, scoped, tag = 'scoped memory for tpu_custom_call.1']
    #allocation5 [shape = 'u8[8192]{0}', space=vmem, size = 0x2000, scoped, tag = 'output window, operand 0, single buffered']
    %8 = vsyncpa [#allocation3], 0
    %9 = vsyncpa [#allocation4], 0
    // Predicated region
    $region2: #{tpu_custom_call.1} parent=1 // pred_check
      _
    $region3: #{tpu_custom_call.1} parent=1 // pred_check_branch
      %11 = sbr.rel (0) target = $region5
    $region4: #{tpu_custom_call.1} parent=1 // pred_region
      %13 = vsyncadd [#allocation3], 0
      %s14 = sshll.u32 %s0, 4
      %s15 = int_to_ptr.hbm [resolvable:$true] %s14
      %s16 = sshll.u32 [#allocation2], 4
      %s17 = int_to_ptr.vmem [resolvable:$true] %s16
      %22 = dma.hbm_to_vmem [thread:$0]  %s15, 256, %s17, [#allocation3], 128, 128, 8
    $region5: #{tpu_custom_call.1} parent=1 // pred_fallthru
      _
    // Predicated region
    $region6: #{tpu_custom_call.1} parent=1 // pred_check
      _
    $region7: #{tpu_custom_call.1} parent=1 // pred_check_branch
      %24 = sbr.rel (0) target = $region9
    $region8: #{tpu_custom_call.1} parent=1 // pred_region
      _
    $region9: #{tpu_custom_call.1} parent=1 // pred_fallthru
      _
    // Predicated region
    $region10: #{tpu_custom_call.1} parent=1 // pred_check
      _
    $region11: #{tpu_custom_call.1} parent=1 // pred_check_branch
      %26 = sbr.rel (0) target = $region13
    $region12: #{tpu_custom_call.1} parent=1 // pred_region
      _
    $region13: #{tpu_custom_call.1} parent=1 // pred_fallthru
      _
    // Predicated region
    $region14: #{tpu_custom_call.1} parent=1 // pred_check
      _
    $region15: #{tpu_custom_call.1} parent=1 // pred_check_branch
      %28 = sbr.rel (0) target = $region17
    $region16: #{tpu_custom_call.1} parent=1 // pred_region
      %30 = dma.done [#allocation3], 256
    $region17: #{tpu_custom_call.1} parent=1 // pred_fallthru
      _
    %v31 = vld [vmem:[#allocation2] sm:$0xff]
    %v32 = vld [vmem:[#allocation2 + $0x8] sm:$0xff]
    %35 = vst [vmem:[#allocation1] ss:$2 sm:$0xff] %v31
    %v36 = vld.sshfl [vmem:[#allocation1] sm:$0xff pattern:$0x75316420]
    %v37 = vld.sshfl [vmem:[#allocation1 + $0x8] sm:$0xff pattern:$0x75316420]
    %s38 = scalar_lea.vmem [#allocation1], 16
    %39 = vst [vmem:[%s38] ss:$2 sm:$0xff] %v32
    %v40 = vld.sshfl [vmem:[#allocation1 + $0x10] sm:$0xff pattern:$0x75316420]
    %v41 = vld.sshfl [vmem:[#allocation1 + $0x18] sm:$0xff pattern:$0x75316420]
    %vm46 = vcmask 1043456
    %v47 = vsel %vm46, %v36, 0.0
    %v48 = vsel %vm46, %v37, 0.0
    %v49 = vadd.f32 %v47, %v48
    %v50 = vsel %vm46, %v40, 0.0
    %v51 = vadd.f32 %v49, %v50
    %v52 = vsel %vm46, %v41, 0.0
    %v53 = vadd.f32 %v51, %v52
    %54 = vadd.xlane.f32.xlu0 %v53
    %v55 = vpop.xlane.xlu0 %54
    %v56 = vrcp.pop 512.0
    %v57 = vmul.f32 512.0, %v56
    %v58 = vsub.f32 1.0, %v57
    %v59 = vmul.f32 %v56, %v58
    %v60 = vadd.f32 %v56, %v59
    %vm61 = vweird.f32 %v56
    %v62 = vsel %vm61, %v56, %v60
    %v63 = vmul.f32 %v55, %v62
    %v66 = vunpack.c.l.s4 839922192
    %v67 = vunpack.c.0.s8 %v66
    %v68 = vperm.slane %v63, %v67
    %v70 = vsub.f32 %v31, %v68
    %v71 = vsub.f32 %v32, %v68
    %v72 = vmul.f32 %v70, %v70
    %v73 = vmul.f32 %v71, %v71
    %76 = vst [vmem:[#allocation1] ss:$2 sm:$0xff] %v72
    %v77 = vld.sshfl [vmem:[#allocation1] sm:$0xff pattern:$0x75316420]
    %v78 = vld.sshfl [vmem:[#allocation1 + $0x8] sm:$0xff pattern:$0x75316420]
    %s79 = scalar_lea.vmem [#allocation1], 16
    %80 = vst [vmem:[%s79] ss:$2 sm:$0xff] %v73
    %v81 = vld.sshfl [vmem:[#allocation1 + $0x10] sm:$0xff pattern:$0x75316420]
    %v82 = vld.sshfl [vmem:[#allocation1 + $0x18] sm:$0xff pattern:$0x75316420]
    %v87 = vsel %vm46, %v77, 0.0
    %v88 = vsel %vm46, %v78, 0.0
    %v89 = vadd.f32 %v87, %v88
    %v90 = vsel %vm46, %v81, 0.0
    %v91 = vadd.f32 %v89, %v90
    %v92 = vsel %vm46, %v82, 0.0
    %v93 = vadd.f32 %v91, %v92
    %94 = vadd.xlane.f32.xlu0 %v93
    %v95 = vpop.xlane.xlu0 %94
    %v96 = vmul.f32 %v95, %v62
    %v97 = vadd.f32 %v96, 1e-05
    %v98 = vrsqrt.pop %v97
    %v99 = vmul.f32 %v98, %v97
    %v100 = vmul.f32 %v99, %v98
    %v101 = vmul.f32 0.5, %v100
    %v102 = vsub.f32 1.5, %v101
    %v103 = vmul.f32 %v98, %v102
    %vm104 = vweird.f32 %v97
    %vm105 = vweird.f32 %v98
    %vm106 = vmor %vm104, %vm105
    %v107 = vsel %vm106, %v98, %v103
    %v108 = vld [vmem:[%s1] sm:$0xf]
    %v109 = vld [vmem:[%s2] sm:$0xf]
    %v110 = vmul.f32 %v107, %v108
    %112 = vset.pattern.permute.xlu0 0
    %113 = vperm.xlu0 %112, %v110
    %v114 = vpop.permute.xlu0 %113
    %v116 = vunpack.c.l.s4 839922192
    %v117 = vunpack.c.0.s8 %v116
    %v118 = vperm.slane %v114, %v117
    %v120 = vmul.f32 %v70, %v118
    %v121 = vmul.f32 %v71, %v118
    %123 = vset.pattern.permute.xlu0 0
    %124 = vperm.xlu0 %123, %v109
    %v125 = vpop.permute.xlu0 %124
    %v127 = vunpack.c.l.s4 839922192
    %v128 = vunpack.c.0.s8 %v127
    %v129 = vperm.slane %v125, %v128
    %v131 = vadd.f32 %v120, %v129
    %v132 = vadd.f32 %v121, %v129
    %133 = vst [vmem:[#allocation5] sm:$0xff] %v131
    %134 = vst [vmem:[#allocation5 + $0x8] sm:$0xff] %v132
    // Predicated region
    $region18: #{tpu_custom_call.1} parent=1 // pred_check
      _
    $region19: #{tpu_custom_call.1} parent=1 // pred_check_branch
      %136 = sbr.rel (0) target = $region21
    $region20: #{tpu_custom_call.1} parent=1 // pred_region
      %138 = vsyncadd [#allocation4], 0
      %s139 = sshll.u32 [#allocation5], 4
      %s140 = int_to_ptr.vmem [resolvable:$true] %s139
      %s141 = sshll.u32 %s3, 4
      %s142 = int_to_ptr.hbm [resolvable:$true] %s141
      %147 = dma.vmem_to_hbm [thread:$0]  %s140, 256, %s142, [#allocation4], 128, 128, 8
    $region21: #{tpu_custom_call.1} parent=1 // pred_fallthru
      _
    // Predicated region
    $region22: #{tpu_custom_call.1} parent=1 // pred_check
      _
    $region23: #{tpu_custom_call.1} parent=1 // pred_check_branch
      %149 = sbr.rel (0) target = $region25
    $region24: #{tpu_custom_call.1} parent=1 // pred_region
      %151 = dma.done [#allocation4], 256
    $region25: #{tpu_custom_call.1} parent=1 // pred_fallthru
      _
    %152 = vsyncpa [#allocation3], 1
    %153 = vsyncpa [#allocation4], 1

</llo_original>
